<compile_context>
chip_gen: v6e
topology: v6e:2x2x1
jax: 0.10.0
libtpu: 0.0.40
codegen_flags: <defaults>
</compile_context>

<pallas_src>
import functools

import jax
import jax.numpy as jnp
from jax.experimental import pallas as pl
from jax.experimental.pallas import tpu as pltpu

_LANE = 128
_NEG_INF = -1e30


def _round_up(x, m):
    return (x + m - 1) // m * m


def _range_softmax(x, lo, hi):
    """Row softmax over lanes [lo, hi) of a lane-dense block.

    Lanes outside the range come out exactly 0, so the full-width store stays
    an unmasked lane-dense vst and the wrapper just slices the valid columns."""
    cols = jax.lax.broadcasted_iota(jnp.int32, x.shape, dimension=1)
    valid = (cols >= lo) & (cols < hi)
    xm = jnp.where(valid, x, _NEG_INF)
    m = jnp.max(xm, axis=-1, keepdims=True)
    e = jnp.where(valid, jnp.exp(xm - m), 0.0)
    s = jnp.sum(e, axis=-1, keepdims=True)
    return e * pl.reciprocal(s, approx=False)


def _cnn_fusion_kernel(text_ref, wb_ref, bb_ref, w1_ref, b1_ref, w2_ref, b2_ref,
                       out_ref, *, class_num, event_num, cls_pad, hid_pad,
                       packed, compute_dtype):
    # bert_fc: [TB, BERT_H] @ [BERT_H, HIDDEN] + bias (f32 MXU accumulation).
    # astype is a no-op when text already streams as bf16 (recommended).
    text = text_ref[...].astype(compute_dtype)
    feat = jnp.dot(text, wb_ref[...], preferred_element_type=jnp.float32) + bb_ref[...]
    # dropout: identity at inference.

    # Fused head matmul: cols [cls_pad-class_num : cls_pad) = c_fc1,
    #                    cols [cls_pad : cls_pad+hid_pad)   = d_fc1.
    # One lane-dense MXU push instead of two badly-shaped (N=2 / N=H) pushes.
    z1 = jnp.dot(feat.astype(compute_dtype), w1_ref[...],
                 preferred_element_type=jnp.float32) + b1_ref[...]

    # class_classifier: Linear(HIDDEN, 2) -> Softmax(dim=1).
    # Class logits sit in the LAST class_num lanes of the first 128-lane group
    # so the result can be packed with the domain head without any lane shuffle.
    cls_soft = _range_softmax(z1[:, :cls_pad], cls_pad - class_num, cls_pad)

    # grad_reverse: identity in the forward pass.
    # d_relu1 = nn.LeakyReLU(True): negative_slope == 1.0 -> identity.
    # TODO(synk): if the author meant inplace=True (default slope 0.01), apply
    # jnp.where(h >= 0, h, 0.01 * h) to `h` below before the d_fc2 matmul.
    h = z1[:, cls_pad:cls_pad + hid_pad]          # lane-aligned (starts at 128), free view

    # d_fc2: dense [hid_pad, e_pad] RHS -- no dead class/padding K rows.
    z2 = jnp.dot(h.astype(compute_dtype), w2_ref[...],
                 preferred_element_type=jnp.float32) + b2_ref[...]
    dom_soft = _range_softmax(z2, 0, event_num)

    if packed:
        # class probs occupy lanes [128-class_num, 128), domain [0, event_num):
        # disjoint (class_num + event_num <= 128), so one add packs both heads
        # into a single 128-wide unmasked store.
        out_ref[...] = cls_soft + dom_soft
    else:
        # event_num > 126: fall back to a [TB, 128 + e_pad] slab (128-aligned concat).
        out_ref[...] = jnp.concatenate([cls_soft, dom_soft], axis=-1)


def pack_cnn_fusion_params(params, compute_dtype=jnp.bfloat16):
    """One-time (weight-load time) packing/padding of the module parameters.

    params: dict of weights ([in, out]) / biases ([1, out]) in f32."""
    hidden = params["wb"].shape[1]
    class_num = params["wc"].shape[1]
    event_num = params["wd2"].shape[1]
    cls_pad = _LANE
    hid_pad = _round_up(hidden, _LANE)
    e_pad = _round_up(event_num, _LANE)
    n1 = cls_pad + hid_pad
    f32 = jnp.float32

    w1 = jnp.zeros((hidden, n1), f32)
    w1 = w1.at[:, cls_pad - class_num:cls_pad].set(params["wc"].astype(f32))
    w1 = w1.at[:, cls_pad:cls_pad + hidden].set(params["wd1"].astype(f32))
    b1 = jnp.zeros((1, n1), f32)
    b1 = b1.at[:, cls_pad - class_num:cls_pad].set(params["bc"].reshape(1, class_num).astype(f32))
    b1 = b1.at[:, cls_pad:cls_pad + hidden].set(params["bd1"].reshape(1, hidden).astype(f32))

    w2 = jnp.zeros((hid_pad, e_pad), f32)
    w2 = w2.at[:hidden, :event_num].set(params["wd2"].astype(f32))
    b2 = jnp.zeros((1, e_pad), f32)
    b2 = b2.at[:, :event_num].set(params["bd2"].reshape(1, event_num).astype(f32))

    return {
        "wb": params["wb"].astype(compute_dtype),
        "bb": params["bb"].reshape(1, hidden).astype(f32),
        "w1": w1.astype(compute_dtype),
        "b1": b1,
        "w2": w2.astype(compute_dtype),
        "b2": b2,
        "class_num": class_num,
        "event_num": event_num,
    }


def cnn_fusion_forward(text, packed_params, *, batch_tile=1024,
                       compute_dtype=jnp.bfloat16):
    """text: [B, BERT_H] (bf16 recommended -- halves streamed HBM bytes; f32 also works).
    packed_params: output of pack_cnn_fusion_params (done once at load time)."""
    B, bert_h = text.shape
    wb, bb = packed_params["wb"], packed_params["bb"]
    w1, b1 = packed_params["w1"], packed_params["b1"]
    w2, b2 = packed_params["w2"], packed_params["b2"]
    class_num = packed_params["class_num"]
    event_num = packed_params["event_num"]

    cls_pad = _LANE
    hid_pad = w2.shape[0]
    e_pad = w2.shape[1]
    n1 = w1.shape[1]

    packed_out = (class_num + event_num) <= _LANE      # both heads in one 128-lane slab
    out_w = cls_pad if packed_out else cls_pad + e_pad

    # Batch tiling: no host-side pad; Pallas masks the ragged last block (garbage
    # rows stay finite per-row and are never stored past B). Cap the tile at
    # ~ceil(B/2) so the "parallel" axis has >=2 steps for v7x's 2 TensorCores.
    sublane = 8 if text.dtype.itemsize >= 4 else (16 if text.dtype.itemsize == 2 else 32)
    tb = max(sublane, _round_up(min(batch_tile, pl.cdiv(B, 2)), sublane))
    grid_b = pl.cdiv(B, tb)

    # Weights/biases: constant index_map -> fetched once, resident across steps.
    const = lambda a: pl.BlockSpec(a.shape, lambda i: (0,) * a.ndim)

    b_eff = grid_b * tb
    flops = 2 * b_eff * (bert_h * wb.shape[1] + wb.shape[1] * n1 + hid_pad * e_pad)
    transcendentals = b_eff * (cls_pad + e_pad)
    bytes_accessed = (B * bert_h * text.dtype.itemsize
                      + sum(a.size * a.dtype.itemsize for a in (wb, bb, w1, b1, w2, b2))
                      + B * out_w * 4)

    kernel = functools.partial(
        _cnn_fusion_kernel, class_num=class_num, event_num=event_num,
        cls_pad=cls_pad, hid_pad=hid_pad, packed=packed_out,
        compute_dtype=compute_dtype)

    out = pl.pallas_call(
        kernel,
        out_shape=jax.ShapeDtypeStruct((B, out_w), jnp.float32),
        grid=(grid_b,),
        in_specs=[pl.BlockSpec((tb, bert_h), lambda i: (i, 0)),
                  const(wb), const(bb), const(w1), const(b1), const(w2), const(b2)],
        out_specs=pl.BlockSpec((tb, out_w), lambda i: (i, 0)),
        compiler_params=pltpu.CompilerParams(
            dimension_semantics=("parallel",),
            vmem_limit_bytes=32 * 1024 * 1024),
        cost_estimate=pl.CostEstimate(
            flops=int(flops), transcendentals=int(transcendentals),
            bytes_accessed=int(bytes_accessed)),
    )(text, wb, bb, w1, b1, w2, b2)

    class_out = out[:, cls_pad - class_num:cls_pad]
    if packed_out:
        domain_out = out[:, :event_num]
    else:
        domain_out = out[:, cls_pad:cls_pad + event_num]
    return class_out, domain_out


def make_params(key, bert_hidden, hidden_dim, class_num, event_num):
    ks = jax.random.split(key, 8)
    scale = 0.05
    return {
        # bert_fc: Linear(bert_hidden, hidden_dim)
        "wb":  scale * jax.random.normal(ks[0], (bert_hidden, hidden_dim), jnp.float32),
        "bb":  scale * jax.random.normal(ks[1], (1, hidden_dim), jnp.float32),
        # class_classifier.c_fc1: Linear(hidden_dim, 2)
        "wc":  scale * jax.random.normal(ks[2], (hidden_dim, class_num), jnp.float32),
        "bc":  scale * jax.random.normal(ks[3], (1, class_num), jnp.float32),
        # domain_classifier.d_fc1: Linear(hidden_dim, hidden_dim)
        "wd1": scale * jax.random.normal(ks[4], (hidden_dim, hidden_dim), jnp.float32),
        "bd1": scale * jax.random.normal(ks[5], (1, hidden_dim), jnp.float32),
        # domain_classifier.d_fc2: Linear(hidden_dim, event_num)
        "wd2": scale * jax.random.normal(ks[6], (hidden_dim, event_num), jnp.float32),
        "bd2": scale * jax.random.normal(ks[7], (1, event_num), jnp.float32),
    }


if __name__ == "__main__":
    # Small synthetic config (stand-ins for bert hidden=768, args.hidden_dim, args.event_num).
    B = 20           # batch (not a multiple of the tile -> exercises the ragged last block)
    BERT_H = 32      # bert hidden size (stand-in for 768)
    HIDDEN = 32      # args.hidden_dim
    CLASS_NUM = 2    # class classifier is hard-coded to 2 outputs
    EVENT_NUM = 8    # args.event_num

    key = jax.random.PRNGKey(0)
    k_text, k_params = jax.random.split(key)
    # Upstream BERT features streamed in bf16 -> half the HBM read bytes of f32.
    text = jax.random.normal(k_text, (B, BERT_H), jnp.float32).astype(jnp.bfloat16)
    params = make_params(k_params, BERT_H, HIDDEN, CLASS_NUM, EVENT_NUM)

    # Weight packing happens ONCE at load time, off the per-call path.
    packed = pack_cnn_fusion_params(params)

    # batch_tile=8 -> tb=16 (bf16 sublane), grid=2: exercises multi-step pipeline + ragged tail.
    class_out, domain_out = cnn_fusion_forward(text, packed, batch_tile=8)
    class_out = jax.block_until_ready(class_out)
    domain_out = jax.block_until_ready(domain_out)

    # Reference in plain JAX (same math as the PyTorch forward, eval mode, f32,
    # same bf16-rounded input the kernel sees).
    text_f32 = text.astype(jnp.float32)
    feat = text_f32 @ params["wb"] + params["bb"]
    cl_ref = jax.nn.softmax(feat @ params["wc"] + params["bc"], axis=1)
    h = feat @ params["wd1"] + params["bd1"]          # LeakyReLU(slope=1.0) == identity
    dm_ref = jax.nn.softmax(h @ params["wd2"] + params["bd2"], axis=1)

    assert class_out.shape == (B, CLASS_NUM) and domain_out.shape == (B, EVENT_NUM)
    # bf16 matmul inputs -> compare probabilities with a loose-but-tight-enough tol.
    assert jnp.allclose(class_out, cl_ref, atol=1e-2), float(jnp.max(jnp.abs(class_out - cl_ref)))
    assert jnp.allclose(domain_out, dm_ref, atol=1e-2), float(jnp.max(jnp.abs(domain_out - dm_ref)))
    assert jnp.allclose(jnp.sum(class_out, axis=1), 1.0, atol=1e-4)
    assert jnp.allclose(jnp.sum(domain_out, axis=1), 1.0, atol=1e-4)

    print("KERNEL_OK")
</pallas_src>

<mosaic_0001>
module attributes {stable_mosaic.version = 11 : i64} {
  func.func @_cnn_fusion_kernel(%arg0: i32, %arg1: memref<16x32xbf16, #tpu.memory_space<vmem>>, %arg2: memref<32x32xbf16, #tpu.memory_space<vmem>>, %arg3: memref<1x32xf32, #tpu.memory_space<vmem>>, %arg4: memref<32x256xbf16, #tpu.memory_space<vmem>>, %arg5: memref<1x256xf32, #tpu.memory_space<vmem>>, %arg6: memref<128x128xbf16, #tpu.memory_space<vmem>>, %arg7: memref<1x128xf32, #tpu.memory_space<vmem>>, %arg8: memref<16x128xf32, #tpu.memory_space<vmem>>) attributes {dimension_semantics = [#tpu.dimension_semantics<parallel>], iteration_bounds = array<i64: 2>, scalar_prefetch = 0 : i64, scratch_operands = 0 : i64, tpu.core_type = #tpu.core_type<tc>, window_params = [{transform_indices = @transform_0, window_bounds = array<i64: 16, 32>}, {pipeline_mode = #tpu.pipeline_mode<synchronous>, transform_indices = @transform_1, window_bounds = array<i64: 32, 32>}, {pipeline_mode = #tpu.pipeline_mode<synchronous>, transform_indices = @transform_2, window_bounds = array<i64: 1, 32>}, {pipeline_mode = #tpu.pipeline_mode<synchronous>, transform_indices = @transform_3, window_bounds = array<i64: 32, 256>}, {pipeline_mode = #tpu.pipeline_mode<synchronous>, transform_indices = @transform_4, window_bounds = array<i64: 1, 256>}, {pipeline_mode = #tpu.pipeline_mode<synchronous>, transform_indices = @transform_5, window_bounds = array<i64: 128, 128>}, {pipeline_mode = #tpu.pipeline_mode<synchronous>, transform_indices = @transform_6, window_bounds = array<i64: 1, 128>}, {transform_indices = @transform_7, window_bounds = array<i64: 16, 128>}]} {
    %c0 = arith.constant 0 : index
    %c0_0 = arith.constant 0 : index
    %0 = vector.load %arg1[%c0, %c0_0] : memref<16x32xbf16, #tpu.memory_space<vmem>>, vector<16x32xbf16>
    %c0_1 = arith.constant 0 : index
    %c0_2 = arith.constant 0 : index
    %1 = vector.load %arg2[%c0_1, %c0_2] : memref<32x32xbf16, #tpu.memory_space<vmem>>, vector<32x32xbf16>
    %cst = arith.constant dense<0.000000e+00> : vector<16x32xf32>
    %2 = tpu.matmul %0, %1, %cst {dimension_numbers = #tpu.dot_dimension_numbers<[1], [0], [0], [1], [0, 0, 1, 1], [], []>} : vector<16x32xbf16>, vector<32x32xbf16>, vector<16x32xf32> -> vector<16x32xf32>
    %c0_3 = arith.constant 0 : index
    %c0_4 = arith.constant 0 : index
    %3 = vector.load %arg3[%c0_3, %c0_4] : memref<1x32xf32, #tpu.memory_space<vmem>>, vector<1x32xf32>
    %4 = vector.broadcast %3 : vector<1x32xf32> to vector<16x32xf32>
    %5 = arith.addf %2, %4 : vector<16x32xf32>
    %6 = arith.truncf %5 : vector<16x32xf32> to vector<16x32xbf16>
    %c0_5 = arith.constant 0 : index
    %c0_6 = arith.constant 0 : index
    %7 = vector.load %arg4[%c0_5, %c0_6] : memref<32x256xbf16, #tpu.memory_space<vmem>>, vector<32x256xbf16>
    %cst_7 = arith.constant dense<0.000000e+00> : vector<16x256xf32>
    %8 = tpu.matmul %6, %7, %cst_7 {dimension_numbers = #tpu.dot_dimension_numbers<[1], [0], [0], [1], [0, 0, 1, 1], [], []>} : vector<16x32xbf16>, vector<32x256xbf16>, vector<16x256xf32> -> vector<16x256xf32>
    %c0_8 = arith.constant 0 : index
    %c0_9 = arith.constant 0 : index
    %9 = vector.load %arg5[%c0_8, %c0_9] : memref<1x256xf32, #tpu.memory_space<vmem>>, vector<1x256xf32>
    %10 = vector.broadcast %9 : vector<1x256xf32> to vector<16x256xf32>
    %11 = arith.addf %8, %10 : vector<16x256xf32>
    %12 = vector.extract_strided_slice %11 {offsets = [0, 0], sizes = [16, 128], strides = [1, 1]} : vector<16x256xf32> to vector<16x128xf32>
    %13 = tpu.iota {dimensions = array<i32: 1>} : vector<16x128xi32>
    %c126_i32 = arith.constant 126 : i32
    %14 = vector.broadcast %c126_i32 : i32 to vector<16x128xi32>
    %15 = arith.cmpi sge, %13, %14 : vector<16x128xi32>
    %c128_i32 = arith.constant 128 : i32
    %16 = vector.broadcast %c128_i32 : i32 to vector<16x128xi32>
    %17 = arith.cmpi slt, %13, %16 : vector<16x128xi32>
    %18 = arith.andi %15, %17 : vector<16x128xi1>
    %cst_10 = arith.constant -1.000000e+30 : f32
    %19 = vector.broadcast %cst_10 : f32 to vector<16x128xf32>
    %20 = arith.select %18, %12, %19 : vector<16x128xi1>, vector<16x128xf32>
    %cst_11 = arith.constant dense<0xFF800000> : vector<16xf32>
    %21 = vector.multi_reduction <maximumf>, %20, %cst_11 [1] : vector<16x128xf32> to vector<16xf32>
    %22 = vector.shape_cast %21 : vector<16xf32> to vector<16x1xf32>
    %23 = vector.broadcast %22 : vector<16x1xf32> to vector<16x128xf32>
    %24 = arith.subf %20, %23 : vector<16x128xf32>
    %25 = math.exp %24 : vector<16x128xf32>
    %cst_12 = arith.constant 0.000000e+00 : f32
    %26 = vector.broadcast %cst_12 : f32 to vector<16x128xf32>
    %27 = arith.select %18, %25, %26 : vector<16x128xi1>, vector<16x128xf32>
    %cst_13 = arith.constant dense<0.000000e+00> : vector<16xf32>
    %28 = vector.multi_reduction <add>, %27, %cst_13 [1] : vector<16x128xf32> to vector<16xf32>
    %29 = vector.shape_cast %28 : vector<16xf32> to vector<16x1xf32>
    %30 = tpu.reciprocal %29 : vector<16x1xf32> -> vector<16x1xf32>
    %31 = vector.broadcast %30 : vector<16x1xf32> to vector<16x128xf32>
    %32 = arith.mulf %27, %31 : vector<16x128xf32>
    %33 = vector.extract_strided_slice %11 {offsets = [0, 128], sizes = [16, 128], strides = [1, 1]} : vector<16x256xf32> to vector<16x128xf32>
    %34 = arith.truncf %33 : vector<16x128xf32> to vector<16x128xbf16>
    %c0_14 = arith.constant 0 : index
    %c0_15 = arith.constant 0 : index
    %35 = vector.load %arg6[%c0_14, %c0_15] : memref<128x128xbf16, #tpu.memory_space<vmem>>, vector<128x128xbf16>
    %cst_16 = arith.constant dense<0.000000e+00> : vector<16x128xf32>
    %36 = tpu.matmul %34, %35, %cst_16 {dimension_numbers = #tpu.dot_dimension_numbers<[1], [0], [0], [1], [0, 0, 1, 1], [], []>} : vector<16x128xbf16>, vector<128x128xbf16>, vector<16x128xf32> -> vector<16x128xf32>
    %c0_17 = arith.constant 0 : index
    %c0_18 = arith.constant 0 : index
    %37 = vector.load %arg7[%c0_17, %c0_18] : memref<1x128xf32, #tpu.memory_space<vmem>>, vector<1x128xf32>
    %38 = vector.broadcast %37 : vector<1x128xf32> to vector<16x128xf32>
    %39 = arith.addf %36, %38 : vector<16x128xf32>
    %40 = tpu.iota {dimensions = array<i32: 1>} : vector<16x128xi32>
    %c0_i32 = arith.constant 0 : i32
    %41 = vector.broadcast %c0_i32 : i32 to vector<16x128xi32>
    %42 = arith.cmpi sge, %40, %41 : vector<16x128xi32>
    %c8_i32 = arith.constant 8 : i32
    %43 = vector.broadcast %c8_i32 : i32 to vector<16x128xi32>
    %44 = arith.cmpi slt, %40, %43 : vector<16x128xi32>
    %45 = arith.andi %42, %44 : vector<16x128xi1>
    %cst_19 = arith.constant -1.000000e+30 : f32
    %46 = vector.broadcast %cst_19 : f32 to vector<16x128xf32>
    %47 = arith.select %45, %39, %46 : vector<16x128xi1>, vector<16x128xf32>
    %cst_20 = arith.constant dense<0xFF800000> : vector<16xf32>
    %48 = vector.multi_reduction <maximumf>, %47, %cst_20 [1] : vector<16x128xf32> to vector<16xf32>
    %49 = vector.shape_cast %48 : vector<16xf32> to vector<16x1xf32>
    %50 = vector.broadcast %49 : vector<16x1xf32> to vector<16x128xf32>
    %51 = arith.subf %47, %50 : vector<16x128xf32>
    %52 = math.exp %51 : vector<16x128xf32>
    %cst_21 = arith.constant 0.000000e+00 : f32
    %53 = vector.broadcast %cst_21 : f32 to vector<16x128xf32>
    %54 = arith.select %45, %52, %53 : vector<16x128xi1>, vector<16x128xf32>
    %cst_22 = arith.constant dense<0.000000e+00> : vector<16xf32>
    %55 = vector.multi_reduction <add>, %54, %cst_22 [1] : vector<16x128xf32> to vector<16xf32>
    %56 = vector.shape_cast %55 : vector<16xf32> to vector<16x1xf32>
    %57 = tpu.reciprocal %56 : vector<16x1xf32> -> vector<16x1xf32>
    %58 = vector.broadcast %57 : vector<16x1xf32> to vector<16x128xf32>
    %59 = arith.mulf %54, %58 : vector<16x128xf32>
    %60 = arith.addf %32, %59 : vector<16x128xf32>
    %c0_23 = arith.constant 0 : index
    %c0_24 = arith.constant 0 : index
    %61 = vector.load %arg8[%c0_23, %c0_24] : memref<16x128xf32, #tpu.memory_space<vmem>>, vector<16x128xf32>
    tpu.vector_store %arg8[%c0_23, %c0_24], %60 {strides = array<i32>} : memref<16x128xf32, #tpu.memory_space<vmem>>, vector<16x128xf32>,
    return
  }
  func.func @transform_0(%arg0: i32) -> (i32, i32) {
    %c0_i32 = arith.constant 0 : i32
    %c0_i32_0 = arith.constant 0 : i32
    return %arg0, %c0_i32 : i32, i32
  }
  func.func @transform_1(%arg0: i32) -> (i32, i32) {
    %c0_i32 = arith.constant 0 : i32
    %c0_i32_0 = arith.constant 0 : i32
    %c0_i32_1 = arith.constant 0 : i32
    return %c0_i32, %c0_i32_0 : i32, i32
  }
  func.func @transform_2(%arg0: i32) -> (i32, i32) {
    %c0_i32 = arith.constant 0 : i32
    %c0_i32_0 = arith.constant 0 : i32
    %c0_i32_1 = arith.constant 0 : i32
    return %c0_i32, %c0_i32_0 : i32, i32
  }
  func.func @transform_3(%arg0: i32) -> (i32, i32) {
    %c0_i32 = arith.constant 0 : i32
    %c0_i32_0 = arith.constant 0 : i32
    %c0_i32_1 = arith.constant 0 : i32
    return %c0_i32, %c0_i32_0 : i32, i32
  }
  func.func @transform_4(%arg0: i32) -> (i32, i32) {
    %c0_i32 = arith.constant 0 : i32
    %c0_i32_0 = arith.constant 0 : i32
    %c0_i32_1 = arith.constant 0 : i32
    return %c0_i32, %c0_i32_0 : i32, i32
  }
  func.func @transform_5(%arg0: i32) -> (i32, i32) {
    %c0_i32 = arith.constant 0 : i32
    %c0_i32_0 = arith.constant 0 : i32
    %c0_i32_1 = arith.constant 0 : i32
    return %c0_i32, %c0_i32_0 : i32, i32
  }
  func.func @transform_6(%arg0: i32) -> (i32, i32) {
    %c0_i32 = arith.constant 0 : i32
    %c0_i32_0 = arith.constant 0 : i32
    %c0_i32_1 = arith.constant 0 : i32
    return %c0_i32, %c0_i32_0 : i32, i32
  }
  func.func @transform_7(%arg0: i32) -> (i32, i32) {
    %c0_i32 = arith.constant 0 : i32
    %c0_i32_0 = arith.constant 0 : i32
    return %arg0, %c0_i32 : i32, i32
  }
}

</mosaic_0001>

<llo_original>
// kernel: tpu_custom_call.1
$region0: #{tpu_custom_call.1}
  #allocation0 [shape = 'u32[]', space=smem, size = 0x4, offset = 0x4, fixed_abs, tag = 'smem constant byte address 0x4 - core index']
  #allocation1 [shape = 'u32[144,128]{1,0:T(1,128)}', space=vmem, size = 0x12000, scoped, tag = 'internal scratch']
  %s0 = inlined_call_operand.hbm [shape: bf16[20,32], index: 0, kind: input, shape index: {}]
  %s1 = inlined_call_operand.hbm [shape: bf16[32,32], index: 1, kind: input, shape index: {}]
  %s2 = inlined_call_operand.vmem [shape: f32[1,32], index: 2, kind: input, shape index: {}]
  %s3 = inlined_call_operand.hbm [shape: bf16[32,256], index: 3, kind: input, shape index: {}]
  %s4 = inlined_call_operand.vmem [shape: f32[1,256], index: 4, kind: input, shape index: {}]
  %s5 = inlined_call_operand.hbm [shape: bf16[128,128], index: 5, kind: input, shape index: {}]
  %s6 = inlined_call_operand.vmem [shape: f32[1,128], index: 6, kind: input, shape index: {}]
  %s7 = inlined_call_operand.hbm [shape: f32[20,128], index: 7, kind: output, shape index: {}]
  %s8 = sld [smem:[#allocation0]]
  $region77: #{tpu_custom_call.1} parent=0
    _
  %s10 = ssub.s32 1, %s8
  %s11 = scalar_select 0, %s10, %s8
  $region1: #{tpu_custom_call.1} parent=0
    #allocation2 [shape = 'u8[8192]{0}', space=vmem, size = 0x2000, scoped, tag = 'input window, operand 0']
    #allocation3 [shape = 's32[2]{0}', space=sflag, size = 0x8, scoped, tag = 'scoped memory for tpu_custom_call.1']
    #allocation4 [shape = 's32[2]{0}', space=sflag, size = 0x8, scoped, tag = 'scoped memory for tpu_custom_call.1']
    #allocation5 [shape = 'u8[8192]{0}', space=vmem, size = 0x2000, scoped, tag = 'input window, operand 1, single buffered']
    #allocation6 [shape = 's32[1]{0}', space=sflag, size = 0x4, scoped, tag = 'scoped memory for tpu_custom_call.1']
    #allocation7 [shape = 'u8[16384]{0}', space=vmem, size = 0x4000, scoped, tag = 'input window, operand 3, single buffered']
    #allocation8 [shape = 'u8[32768]{0}', space=vmem, size = 0x8000, scoped, tag = 'input window, operand 5, single buffered']
    #allocation9 [shape = 's32[1]{0}', space=sflag, size = 0x4, scoped, tag = 'scoped memory for tpu_custom_call.1']
    #allocation10 [shape = 'u8[16384]{0}', space=vmem, size = 0x4000, scoped, tag = 'output window, operand 0']
    %12 = vsyncpa [#allocation3], 0
    %s13 = scalar_lea.sflag [#allocation3], 1
    %14 = vsyncpa %s13, 0
    %15 = vsyncpa [#allocation6], 0
    %16 = vsyncpa [#allocation9], 0
    %17 = vsyncpa [#allocation4], 0
    %s18 = scalar_lea.sflag [#allocation4], 1
    %19 = vsyncpa %s18, 0
    loop: start=0, step=1, limit=4
    $region2: #{tpu_custom_call.1} parent=1 // loop_pre_header
      _
    $region3: #{tpu_custom_call.1} parent=1 // loop_header
      %s21 = sphi 0, %s25
      %p22 = scmp.ge.s32.totalorder %s21, 4
      %s31 = sphi 0, %s33
      %s34 = sphi 0, %s31
      %s35 = sphi 0, %s34
      %s51 = sphi 0, %s35
      %s55 = sphi 0, %s55
      %s57 = sphi 0, %s55
      %s58 = sphi 0, %s57
      %s72 = sphi 0, %s58
      %s76 = sphi 0, %s76
      %s78 = sphi 0, %s76
      %s79 = sphi 0, %s78
      %s93 = sphi 0, %s79
      %s97 = sphi 0, %s97
      %s99 = sphi 0, %s97
      %s100 = sphi 0, %s99
      %s114 = sphi 0, %s100
      %s118 = sphi 0, %s118
      %s120 = sphi 0, %s118
      %s121 = sphi 0, %s120
      %s135 = sphi 0, %s121
      %s139 = sphi 0, %s139
      %s141 = sphi 0, %s139
      %s142 = sphi 0, %s141
      %s156 = sphi 0, %s142
      %s160 = sphi 0, %s160
      %s162 = sphi 0, %s160
      %s163 = sphi 0, %s162
      %s177 = sphi 0, %s163
      %s183 = sphi 0, %s185
      %s186 = sphi 0, %s183
      %s187 = sphi 0, %s186
      %s203 = sphi 0, %s187
    $region4: #{tpu_custom_call.1} parent=1 // loop_header_branch
      %24 = sbr.rel (%p22) target = $region8
    $region5: #{tpu_custom_call.1} parent=1 // loop_body
      %s26 = ssub.s32 %s21, 1
      %s27 = ssub.s32 %s21, 2
      %s28 = sadd.s32 %s21, 1
      %s29 = ssub.s32 %s21, %s28
      %p30 = scmp.eq.s32.totalorder %s29, 0
      %s32 = sadd.s32 %s31, 1
      %s33 = scalar_select %p30, %s31, %s32
      %p36 = pneg %p30
      %p37 = scmp.eq.s32.totalorder %s21, 1
      %p38 = por %p36, %p37
      %p39 = scmp.ne.s32.totalorder %s31, %s34
      %p40 = scmp.eq.s32.totalorder %s21, 0
      %p41 = por %p39, %p40
      %p42 = scmp.ne.s32.totalorder %s31, %s34
      %p43 = scmp.eq.s32.totalorder %s26, 1
      %p44 = por %p42, %p43
      %p45 = scmp.ne.s32.totalorder %s34, %s35
      %p46 = scmp.eq.s32.totalorder %s26, 0
      %p47 = por %p45, %p46
      %p48 = scmp.ne.s32.totalorder %s34, %s35
      %p49 = scmp.eq.s32.totalorder %s27, 1
      %p50 = por %p48, %p49
      %p52 = scmp.ne.s32.totalorder %s35, %s51
      %p53 = scmp.eq.s32.totalorder %s27, 0
      %p54 = por %p52, %p53
      %s56 = sadd.s32 %s55, 1
      %p59 = scmp.eq.s32.totalorder %s21, 1
      %p60 = scmp.ne.s32.totalorder %s55, %s57
      %p61 = scmp.eq.s32.totalorder %s21, 0
      %p62 = por %p60, %p61
      %p63 = scmp.ne.s32.totalorder %s55, %s57
      %p64 = scmp.eq.s32.totalorder %s26, 1
      %p65 = por %p63, %p64
      %p66 = scmp.ne.s32.totalorder %s57, %s58
      %p67 = scmp.eq.s32.totalorder %s26, 0
      %p68 = por %p66, %p67
      %p69 = scmp.ne.s32.totalorder %s57, %s58
      %p70 = scmp.eq.s32.totalorder %s27, 1
      %p71 = por %p69, %p70
      %p73 = scmp.ne.s32.totalorder %s58, %s72
      %p74 = scmp.eq.s32.totalorder %s27, 0
      %p75 = por %p73, %p74
      %s77 = sadd.s32 %s76, 1
      %p80 = scmp.eq.s32.totalorder %s21, 1
      %p81 = scmp.ne.s32.totalorder %s76, %s78
      %p82 = scmp.eq.s32.totalorder %s21, 0
      %p83 = por %p81, %p82
      %p84 = scmp.ne.s32.totalorder %s76, %s78
      %p85 = scmp.eq.s32.totalorder %s26, 1
      %p86 = por %p84, %p85
      %p87 = scmp.ne.s32.totalorder %s78, %s79
      %p88 = scmp.eq.s32.totalorder %s26, 0
      %p89 = por %p87, %p88
      %p90 = scmp.ne.s32.totalorder %s78, %s79
      %p91 = scmp.eq.s32.totalorder %s27, 1
      %p92 = por %p90, %p91
      %p94 = scmp.ne.s32.totalorder %s79, %s93
      %p95 = scmp.eq.s32.totalorder %s27, 0
      %p96 = por %p94, %p95
      %s98 = sadd.s32 %s97, 1
      %p101 = scmp.eq.s32.totalorder %s21, 1
      %p102 = scmp.ne.s32.totalorder %s97, %s99
      %p103 = scmp.eq.s32.totalorder %s21, 0
      %p104 = por %p102, %p103
      %p105 = scmp.ne.s32.totalorder %s97, %s99
      %p106 = scmp.eq.s32.totalorder %s26, 1
      %p107 = por %p105, %p106
      %p108 = scmp.ne.s32.totalorder %s99, %s100
      %p109 = scmp.eq.s32.totalorder %s26, 0
      %p110 = por %p108, %p109
      %p111 = scmp.ne.s32.totalorder %s99, %s100
      %p112 = scmp.eq.s32.totalorder %s27, 1
      %p113 = por %p111, %p112
      %p115 = scmp.ne.s32.totalorder %s100, %s114
      %p116 = scmp.eq.s32.totalorder %s27, 0
      %p117 = por %p115, %p116
      %s119 = sadd.s32 %s118, 1
      %p122 = scmp.eq.s32.totalorder %s21, 1
      %p123 = scmp.ne.s32.totalorder %s118, %s120
      %p124 = scmp.eq.s32.totalorder %s21, 0
      %p125 = por %p123, %p124
      %p126 = scmp.ne.s32.totalorder %s118, %s120
      %p127 = scmp.eq.s32.totalorder %s26, 1
      %p128 = por %p126, %p127
      %p129 = scmp.ne.s32.totalorder %s120, %s121
      %p130 = scmp.eq.s32.totalorder %s26, 0
      %p131 = por %p129, %p130
      %p132 = scmp.ne.s32.totalorder %s120, %s121
      %p133 = scmp.eq.s32.totalorder %s27, 1
      %p134 = por %p132, %p133
      %p136 = scmp.ne.s32.totalorder %s121, %s135
      %p137 = scmp.eq.s32.totalorder %s27, 0
      %p138 = por %p136, %p137
      %s140 = sadd.s32 %s139, 1
      %p143 = scmp.eq.s32.totalorder %s21, 1
      %p144 = scmp.ne.s32.totalorder %s139, %s141
      %p145 = scmp.eq.s32.totalorder %s21, 0
      %p146 = por %p144, %p145
      %p147 = scmp.ne.s32.totalorder %s139, %s141
      %p148 = scmp.eq.s32.totalorder %s26, 1
      %p149 = por %p147, %p148
      %p150 = scmp.ne.s32.totalorder %s141, %s142
      %p151 = scmp.eq.s32.totalorder %s26, 0
      %p152 = por %p150, %p151
      %p153 = scmp.ne.s32.totalorder %s141, %s142
      %p154 = scmp.eq.s32.totalorder %s27, 1
      %p155 = por %p153, %p154
      %p157 = scmp.ne.s32.totalorder %s142, %s156
      %p158 = scmp.eq.s32.totalorder %s27, 0
      %p159 = por %p157, %p158
      %s161 = sadd.s32 %s160, 1
      %p164 = scmp.eq.s32.totalorder %s21, 1
      %p165 = scmp.ne.s32.totalorder %s160, %s162
      %p166 = scmp.eq.s32.totalorder %s21, 0
      %p167 = por %p165, %p166
      %p168 = scmp.ne.s32.totalorder %s160, %s162
      %p169 = scmp.eq.s32.totalorder %s26, 1
      %p170 = por %p168, %p169
      %p171 = scmp.ne.s32.totalorder %s162, %s163
      %p172 = scmp.eq.s32.totalorder %s26, 0
      %p173 = por %p171, %p172
      %p174 = scmp.ne.s32.totalorder %s162, %s163
      %p175 = scmp.eq.s32.totalorder %s27, 1
      %p176 = por %p174, %p175
      %p178 = scmp.ne.s32.totalorder %s163, %s177
      %p179 = scmp.eq.s32.totalorder %s27, 0
      %p180 = por %p178, %p179
      %s181 = ssub.s32 %s21, %s28
      %p182 = scmp.eq.s32.totalorder %s181, 0
      %s184 = sadd.s32 %s183, 1
      %s185 = scalar_select %p182, %s183, %s184
      %p188 = pneg %p182
      %p189 = scmp.eq.s32.totalorder %s21, 1
      %p190 = por %p188, %p189
      %p191 = scmp.ne.s32.totalorder %s183, %s186
      %p192 = scmp.eq.s32.totalorder %s21, 0
      %p193 = por %p191, %p192
      %p194 = scmp.ne.s32.totalorder %s183, %s186
      %p195 = scmp.eq.s32.totalorder %s26, 1
      %p196 = por %p194, %p195
      %p197 = scmp.ne.s32.totalorder %s186, %s187
      %p198 = scmp.eq.s32.totalorder %s26, 0
      %p199 = por %p197, %p198
      %p200 = scmp.ne.s32.totalorder %s186, %s187
      %p201 = scmp.eq.s32.totalorder %s27, 1
      %p202 = por %p200, %p201
      %p204 = scmp.ne.s32.totalorder %s187, %s203
      %p205 = scmp.eq.s32.totalorder %s27, 0
      %p206 = por %p204, %p205
      %p207 = scmp.le.s32.totalorder 1, %s21
      %p208 = scmp.lt.s32.totalorder %s21, 3
      %p209 = pnand %p207, %p208
      %p210 = pneg %p209
      // Predicated region
      $region9: #{tpu_custom_call.1} parent=5 // pred_check
        _
      $region10: #{tpu_custom_call.1} parent=5 // pred_check_branch
        %212 = sbr.rel (%p209) target = $region12
      $region11: #{tpu_custom_call.1} parent=5 // pred_region
        %s213 = ssub.s32 %s21, 1
        // Predicated region
        $region13: #{tpu_custom_call.1} parent=11 // pred_check
          %p214 = pneg %p68
        $region14: #{tpu_custom_call.1} parent=11 // pred_check_branch
          %216 = sbr.rel (%p214) target = $region16
        $region15: #{tpu_custom_call.1} parent=11 // pred_region
          %s218 = ssub.s32 256, 256
          %219 = vsyncadd [#allocation6], %s218
          %s220 = sshll.u32 [#allocation5], 4
          %s221 = int_to_ptr.vmem [resolvable:$true] %s220
          %226 = dma.hbm_to_vmem [thread:$0]  %s1, 256, %s221, [#allocation6], 64, 64, 4
        $region16: #{tpu_custom_call.1} parent=11 // pred_fallthru
          _
        // Predicated region
        $region17: #{tpu_custom_call.1} parent=11 // pred_check
          %p227 = pneg %p89
        $region18: #{tpu_custom_call.1} parent=11 // pred_check_branch
          %229 = sbr.rel (%p227) target = $region20
        $region19: #{tpu_custom_call.1} parent=11 // pred_region
          _
        $region20: #{tpu_custom_call.1} parent=11 // pred_fallthru
          _
        // Predicated region
        $region21: #{tpu_custom_call.1} parent=11 // pred_check
          %p230 = pneg %p110
        $region22: #{tpu_custom_call.1} parent=11 // pred_check_branch
          %232 = sbr.rel (%p230) target = $region24
        $region23: #{tpu_custom_call.1} parent=11 // pred_region
          %s234 = ssub.s32 512, 512
          %235 = vsyncadd [#allocation6], %s234
          %s236 = sshll.u32 [#allocation7], 4
          %s237 = int_to_ptr.vmem [resolvable:$true] %s236
          %242 = dma.hbm_to_vmem [thread:$0]  %s3, 512, %s237, [#allocation6], 128, 128, 8
        $region24: #{tpu_custom_call.1} parent=11 // pred_fallthru
          _
        // Predicated region
        $region25: #{tpu_custom_call.1} parent=11 // pred_check
          %p243 = pneg %p131
        $region26: #{tpu_custom_call.1} parent=11 // pred_check_branch
          %245 = sbr.rel (%p243) target = $region28
        $region27: #{tpu_custom_call.1} parent=11 // pred_region
          _
        $region28: #{tpu_custom_call.1} parent=11 // pred_fallthru
          _
        // Predicated region
        $region29: #{tpu_custom_call.1} parent=11 // pred_check
          %p246 = pneg %p152
        $region30: #{tpu_custom_call.1} parent=11 // pred_check_branch
          %248 = sbr.rel (%p246) target = $region32
        $region31: #{tpu_custom_call.1} parent=11 // pred_region
          %s250 = ssub.s32 1024, 1024
          %251 = vsyncadd [#allocation9], %s250
          %s252 = sshll.u32 [#allocation8], 4
          %s253 = int_to_ptr.vmem [resolvable:$true] %s252
          %258 = dma.hbm_to_vmem [thread:$0]  %s5, 1024, %s253, [#allocation9], 64, 64, 4
        $region32: #{tpu_custom_call.1} parent=11 // pred_fallthru
          _
        // Predicated region
        $region33: #{tpu_custom_call.1} parent=11 // pred_check
          %p259 = pneg %p173
        $region34: #{tpu_custom_call.1} parent=11 // pred_check_branch
          %261 = sbr.rel (%p259) target = $region36
        $region35: #{tpu_custom_call.1} parent=11 // pred_region
          _
        $region36: #{tpu_custom_call.1} parent=11 // pred_fallthru
          _
      $region12: #{tpu_custom_call.1} parent=5 // pred_fallthru
        _
      %p262 = scmp.lt.s32.totalorder %s21, 2
      // Predicated region
      $region37: #{tpu_custom_call.1} parent=5 // pred_check
        %p263 = pneg %p262
      $region38: #{tpu_custom_call.1} parent=5 // pred_check_branch
        %265 = sbr.rel (%p263) target = $region40
      $region39: #{tpu_custom_call.1} parent=5 // pred_region
        // Predicated region
        $region41: #{tpu_custom_call.1} parent=39 // pred_check
          %p266 = pneg %p41
        $region42: #{tpu_custom_call.1} parent=39 // pred_check_branch
          %268 = sbr.rel (%p266) target = $region44
        $region43: #{tpu_custom_call.1} parent=39 // pred_region
          %s269 = sand.u32 %s31, 1
          %s270 = scalar_lea.sflag [#allocation3], %s269
          %s271 = sand.u32 %s31, 1
          %s272 = smul.addr %s271, 8
          %s273 = scalar_lea.vmem [#allocation2], %s272
          %s274 = smul.u32 2, %s21
          %s275 = ssub.s32 3, %s274
          %p276 = scmp.lt.s32.totalorder %s275, 2
          %s277 = scalar_select %p276, %s275, 2
          %s278 = smul.u32 64, %s277
          %s280 = ssub.s32 128, %s278
          %281 = vsyncadd %s270, %s280
          %p282 = scmp.ne.s32.totalorder 0, %s278
          %s283 = smul.addr %s274, 64
          %s284 = scalar_lea.hbm %s0, %s283
          %s285 = smul.u32 4, %s277
          %s286 = sshll.u32 %s273, 4
          %s287 = int_to_ptr.vmem [resolvable:$true] %s286
          %s288 = sshll.u32 %s285, 4
          %292 = dma.hbm_to_vmem [thread:$0]  (%p282), %s284, %s288, %s287, %s270, 64, 64, 4
        $region44: #{tpu_custom_call.1} parent=39 // pred_fallthru
          _
      $region40: #{tpu_custom_call.1} parent=5 // pred_fallthru
        _
      %p293 = scmp.le.s32.totalorder 1, %s21
      %p294 = scmp.lt.s32.totalorder %s21, 3
      %p295 = pnand %p293, %p294
      %p296 = pneg %p295
      // Predicated region
      $region45: #{tpu_custom_call.1} parent=5 // pred_check
        _
      $region46: #{tpu_custom_call.1} parent=5 // pred_check_branch
        %298 = sbr.rel (%p295) target = $region48
      $region47: #{tpu_custom_call.1} parent=5 // pred_region
        %s299 = ssub.s32 %s21, 1
        %s300 = sand.u32 %s34, 1
        %s301 = scalar_lea.sflag [#allocation3], %s300
        %s302 = sand.u32 %s34, 1
        %s303 = smul.addr %s302, 8
        %s304 = scalar_lea.vmem [#allocation2], %s303
        // Predicated region
        $region49: #{tpu_custom_call.1} parent=47 // pred_check
          %p305 = pneg %p47
        $region50: #{tpu_custom_call.1} parent=47 // pred_check_branch
          %307 = sbr.rel (%p305) target = $region52
        $region51: #{tpu_custom_call.1} parent=47 // pred_region
          %308 = dma.done %s301, 128
        $region52: #{tpu_custom_call.1} parent=47 // pred_fallthru
          _
        // Predicated region
        $region53: #{tpu_custom_call.1} parent=47 // pred_check
          %p309 = pneg %p68
        $region54: #{tpu_custom_call.1} parent=47 // pred_check_branch
          %311 = sbr.rel (%p309) target = $region56
        $region55: #{tpu_custom_call.1} parent=47 // pred_region
          %312 = dma.done [#allocation6], 256
        $region56: #{tpu_custom_call.1} parent=47 // pred_fallthru
          _
        // Predicated region
        $region57: #{tpu_custom_call.1} parent=47 // pred_check
          %p313 = pneg %p110
        $region58: #{tpu_custom_call.1} parent=47 // pred_check_branch
          %315 = sbr.rel (%p313) target = $region60
        $region59: #{tpu_custom_call.1} parent=47 // pred_region
          %316 = dma.done [#allocation6], 512
        $region60: #{tpu_custom_call.1} parent=47 // pred_fallthru
          _
        // Predicated region
        $region61: #{tpu_custom_call.1} parent=47 // pred_check
          %p317 = pneg %p152
        $region62: #{tpu_custom_call.1} parent=47 // pred_check_branch
          %319 = sbr.rel (%p317) target = $region64
        $region63: #{tpu_custom_call.1} parent=47 // pred_region
          %320 = dma.done [#allocation9], 1024
        $region64: #{tpu_custom_call.1} parent=47 // pred_fallthru
          _
        %s321 = sand.u32 %s34, 1
        %s322 = scalar_lea.sflag [#allocation3], %s321
        %s323 = sand.u32 %s34, 1
        %s324 = smul.addr %s323, 8
        %s325 = scalar_lea.vmem [#allocation2], %s324
        %p326 = pneg %p47
        %p327 = pneg %p44
        %p328 = pneg %p68
        %p329 = pneg %p65
        %p330 = pneg %p89
        %p331 = pneg %p86
        %p332 = pneg %p110
        %p333 = pneg %p107
        %p334 = pneg %p131
        %p335 = pneg %p128
        %p336 = pneg %p152
        %p337 = pneg %p149
        %p338 = pneg %p173
        %p339 = pneg %p170
        %p340 = pneg %p199
        %p341 = pneg %p196
        %s342 = sand.u32 %s186, 1
        %s343 = scalar_lea.sflag [#allocation4], %s342
        %s344 = sand.u32 %s186, 1
        %s345 = smul.addr %s344, 16
        %s346 = scalar_lea.vmem [#allocation10], %s345
        %s347 = smul.u32 2, %s26
        %s348 = ssub.s32 3, %s347
        %p349 = scmp.lt.s32.totalorder %s348, 2
        %s350 = scalar_select %p349, %s348, 2
        %s351 = smul.u32 64, %s350
        %s352 = smul.u32 2, %s26
        %s353 = ssub.s32 3, %s352
        %p354 = scmp.lt.s32.totalorder %s353, 2
        %s355 = scalar_select %p354, %s353, 2
        %s356 = smul.u32 128, %s355
        %v358 = vld [vmem:[%s304] sm:$0xf]
        %v359 = vld [vmem:[%s304 + $0x4] sm:$0xf]
        %v360 = vld [vmem:[#allocation5] sm:$0xf]
        %v361 = vld [vmem:[#allocation5 + $0x4] sm:$0xf]
        %v362 = vld [vmem:[#allocation5 + $0x8] sm:$0xf]
        %v363 = vld [vmem:[#allocation5 + $0xc] sm:$0xf]
        %v364 = vld [vmem:[%s2] sm:$0x1]
        %v366 = vlaneseq
        %v367 = vshrl.u32 %v366, 7
        %v368 = vsub.s32 0, %v367
        %v369 = vrot.slane %v364, %v368
        %v373 = vunpack.c.l.b16 %v358
        %v374 = vunpack.c.l.b16 %v359
        %v375 = vpack.c.b16 %v374, %v373
        %v380 = vunpack.c.l.b16 %v360
        %v381 = vunpack.c.l.b16 %v361
        %v382 = vunpack.c.l.b16 %v362
        %v383 = vunpack.c.l.b16 %v363
        %v384 = vpack.c.b16 %v381, %v380
        %v385 = vpack.c.b16 %v383, %v382
        %vm388 = vcmask 261120
        %v390 = vsel %vm388, %v375, 0
        %392 = vmatprep.subr.bf16.mxu0 0
        %393 = vmatpush1.bf16.msra.mxu0 0
        %394 = vmatprep.subr.bf16.mxu0 0
        %395 = vmatpush1.bf16.msra.mxu0 0
        %396 = vmatprep.subr.bf16.mxu0 0
        %397 = vmatpush1.bf16.msra.mxu0 0
        %398 = vmatprep.subr.bf16.mxu0 0
        %399 = vmatpush1.bf16.msra.mxu0 0
        %400 = vmatprep.subr.bf16.mxu0 0
        %401 = vmatpush1.bf16.msra.mxu0 0
        %402 = vmatprep.subr.bf16.mxu0 0
        %403 = vmatpush1.bf16.msra.mxu0 0
        %404 = vmatprep.subr.bf16.mxu0 0
        %405 = vmatpush1.bf16.msra.mxu0 %v385
        %406 = vmatprep.subr.bf16.mxu0 0
        %407 = vmatpush1.bf16.msra.mxu0 %v384
        %408 = vmatprep.subr.bf16.mxu0 0
        %409 = vmatpush2.bf16.msra.mxu0 0
        %410 = vmatprep.subr.bf16.mxu0 0
        %411 = vmatpush2.bf16.msra.mxu0 0
        %412 = vmatprep.subr.bf16.mxu0 0
        %413 = vmatpush2.bf16.msra.mxu0 0
        %414 = vmatprep.subr.bf16.mxu0 0
        %415 = vmatpush2.bf16.msra.mxu0 0
        %416 = vmatprep.subr.bf16.mxu0 0
        %417 = vmatpush2.bf16.msra.mxu0 0
        %418 = vmatprep.subr.bf16.mxu0 0
        %419 = vmatpush2.bf16.msra.mxu0 0
        %420 = vmatprep.subr.bf16.mxu0 0
        %421 = vmatpush2.bf16.msra.mxu0 0
        %422 = vmatprep.subr.bf16.mxu0 0
        %423 = vmatpush2.bf16.msra.mxu0 0
        %424 = vmatprep.mubr.bf16.mxu0 0
        %425 = vmatmul.mubr.bf16.gmra.mxu0 %v390
        %v426 = vpop.f32.mrf.mxu0
        %v427 = vadd.f32 %v369, %v426
        %v428 = vpop.f32.mrf.mxu0
        %v429 = vpop.f32.mrf.mxu0
        %v430 = vadd.f32 %v369, %v429
        %v431 = vpop.f32.mrf.mxu0
        %432 = vdwg.mxu0
        %v433 = vpack.c.bf16 %v430, %v427
        %v434 = vld [vmem:[#allocation7] sm:$0xff]
        %v435 = vld [vmem:[#allocation7 + $0x8] sm:$0xff]
        %v436 = vld [vmem:[#allocation7 + $0x10] sm:$0xff]
        %v437 = vld [vmem:[#allocation7 + $0x18] sm:$0xff]
        %v438 = vld [vmem:[%s4] sm:$0x3]
        %v440 = vlaneseq
        %v441 = vshrl.u32 %v440, 7
        %v442 = vsub.s32 0, %v441
        %v443 = vrot.slane %v438, %v442
        %v444 = vlaneseq
        %v445 = vshrl.u32 %v444, 7
        %v446 = vsub.s32 1, %v445
        %v447 = vrot.slane %v438, %v446
        %v454 = vunpack.c.l.b16 %v434
        %v455 = vunpack.c.h.b16 %v434
        %v456 = vunpack.c.l.b16 %v435
        %v457 = vunpack.c.h.b16 %v435
        %v458 = vunpack.c.l.b16 %v436
        %v459 = vunpack.c.h.b16 %v436
        %v460 = vunpack.c.l.b16 %v437
        %v461 = vunpack.c.h.b16 %v437
        %v462 = vpack.c.b16 %v456, %v454
        %v463 = vpack.c.b16 %v457, %v455
        %v464 = vpack.c.b16 %v460, %v458
        %v465 = vpack.c.b16 %v461, %v459
        %v471 = vsel %vm388, %v433, 0
        %473 = vmatprep.subr.bf16.mxu0 0
        %474 = vmatpush1.bf16.msra.mxu0 0
        %475 = vmatprep.subr.bf16.mxu0 0
        %476 = vmatpush1.bf16.msra.mxu0 0
        %477 = vmatprep.subr.bf16.mxu0 0
        %478 = vmatpush1.bf16.msra.mxu0 0
        %479 = vmatprep.subr.bf16.mxu0 0
        %480 = vmatpush1.bf16.msra.mxu0 0
        %481 = vmatprep.subr.bf16.mxu0 0
        %482 = vmatpush1.bf16.msra.mxu0 0
        %483 = vmatprep.subr.bf16.mxu0 0
        %484 = vmatpush1.bf16.msra.mxu0 0
        %485 = vmatprep.subr.bf16.mxu0 %v465
        %486 = vmatpush1.bf16.msra.mxu0 %v464
        %487 = vmatprep.subr.bf16.mxu0 %v463
        %488 = vmatpush1.bf16.msra.mxu0 %v462
        %489 = vmatprep.subr.bf16.mxu0 0
        %490 = vmatpush2.bf16.msra.mxu0 0
        %491 = vmatprep.subr.bf16.mxu0 0
        %492 = vmatpush2.bf16.msra.mxu0 0
        %493 = vmatprep.subr.bf16.mxu0 0
        %494 = vmatpush2.bf16.msra.mxu0 0
        %495 = vmatprep.subr.bf16.mxu0 0
        %496 = vmatpush2.bf16.msra.mxu0 0
        %497 = vmatprep.subr.bf16.mxu0 0
        %498 = vmatpush2.bf16.msra.mxu0 0
        %499 = vmatprep.subr.bf16.mxu0 0
        %500 = vmatpush2.bf16.msra.mxu0 0
        %501 = vmatprep.subr.bf16.mxu0 0
        %502 = vmatpush2.bf16.msra.mxu0 0
        %503 = vmatprep.subr.bf16.mxu0 0
        %504 = vmatpush2.bf16.msra.mxu0 0
        %505 = vmatprep.mubr.bf16.mxu0 0
        %506 = vmatmul.mubr.bf16.gmra.mxu0 %v471
        %v507 = vpop.f32.mrf.mxu0
        %v508 = vadd.f32 %v443, %v507
        %v509 = vpop.f32.mrf.mxu0
        %v510 = vadd.f32 %v447, %v509
        %v511 = vpop.f32.mrf.mxu0
        %v512 = vadd.f32 %v443, %v511
        %v513 = vpop.f32.mrf.mxu0
        %v514 = vadd.f32 %v447, %v513
        %515 = vdwg.mxu0
        %v516 = vlaneseq
        %v517 = vand.u32 %v516, 127
        %vm518 = vcmp.ge.s32.totalorder %v517, 126
        %vm519 = vcmp.lt.s32.totalorder %v517, 128
        %vm520 = vmand %vm518, %vm519
        %v521 = vsel %vm520, %v508, -1e+30
        %v522 = vsel %vm520, %v512, -1e+30
        %523 = vmax.xlane.f32.xlu0 %v521
        %v524 = vpop.xlane.xlu0 %523
        %525 = vmax.xlane.f32.xlu0 %v522
        %v526 = vpop.xlane.xlu0 %525
        %v527 = vsub.f32 %v521, %v524
        %v528 = vsub.f32 %v522, %v526
        %v529 = vmul.f32 %v527, 1.442695
        %v530 = vpow.pop %v529
        %v531 = vmul.f32 %v528, 1.442695
        %v532 = vpow.pop %v531
        %v533 = vsel %vm520, %v530, 0.0
        %v534 = vsel %vm520, %v532, 0.0
        %535 = vadd.xlane.f32.xlu0 %v533
        %v536 = vpop.xlane.xlu0 %535
        %537 = vadd.xlane.f32.xlu0 %v534
        %v538 = vpop.xlane.xlu0 %537
        %v539 = vrcp.pop %v536
        %v540 = vrcp.pop %v538
        %v541 = vmul.f32 %v533, %v539
        %v542 = vmul.f32 %v534, %v540
        %v543 = vpack.c.bf16 %v514, %v510
        %v544 = vld [vmem:[#allocation8] sm:$0xf]
        %v545 = vld [vmem:[#allocation8 + $0x4] sm:$0xf]
        %v546 = vld [vmem:[#allocation8 + $0x8] sm:$0xf]
        %v547 = vld [vmem:[#allocation8 + $0xc] sm:$0xf]
        %v548 = vld [vmem:[#allocation8 + $0x10] sm:$0xf]
        %v549 = vld [vmem:[#allocation8 + $0x14] sm:$0xf]
        %v550 = vld [vmem:[#allocation8 + $0x18] sm:$0xf]
        %v551 = vld [vmem:[#allocation8 + $0x1c] sm:$0xf]
        %v552 = vld [vmem:[#allocation8 + $0x20] sm:$0xf]
        %v553 = vld [vmem:[#allocation8 + $0x24] sm:$0xf]
        %v554 = vld [vmem:[#allocation8 + $0x28] sm:$0xf]
        %v555 = vld [vmem:[#allocation8 + $0x2c] sm:$0xf]
        %v556 = vld [vmem:[#allocation8 + $0x30] sm:$0xf]
        %v557 = vld [vmem:[#allocation8 + $0x34] sm:$0xf]
        %v558 = vld [vmem:[#allocation8 + $0x38] sm:$0xf]
        %v559 = vld [vmem:[#allocation8 + $0x3c] sm:$0xf]
        %v560 = vld [vmem:[%s6] sm:$0x1]
        %v562 = vlaneseq
        %v563 = vshrl.u32 %v562, 7
        %v564 = vsub.s32 0, %v563
        %v565 = vrot.slane %v560, %v564
        %v583 = vunpack.c.l.b16 %v544
        %v584 = vunpack.c.l.b16 %v545
        %v585 = vunpack.c.l.b16 %v546
        %v586 = vunpack.c.l.b16 %v547
        %v587 = vunpack.c.l.b16 %v548
        %v588 = vunpack.c.l.b16 %v549
        %v589 = vunpack.c.l.b16 %v550
        %v590 = vunpack.c.l.b16 %v551
        %v591 = vunpack.c.l.b16 %v552
        %v592 = vunpack.c.l.b16 %v553
        %v593 = vunpack.c.l.b16 %v554
        %v594 = vunpack.c.l.b16 %v555
        %v595 = vunpack.c.l.b16 %v556
        %v596 = vunpack.c.l.b16 %v557
        %v597 = vunpack.c.l.b16 %v558
        %v598 = vunpack.c.l.b16 %v559
        %v599 = vpack.c.b16 %v584, %v583
        %v600 = vpack.c.b16 %v586, %v585
        %v601 = vpack.c.b16 %v588, %v587
        %v602 = vpack.c.b16 %v590, %v589
        %v603 = vpack.c.b16 %v592, %v591
        %v604 = vpack.c.b16 %v594, %v593
        %v605 = vpack.c.b16 %v596, %v595
        %v606 = vpack.c.b16 %v598, %v597
        %615 = vmatprep.subr.bf16.mxu0 0
        %616 = vmatpush1.bf16.msra.mxu0 %v606
        %617 = vmatprep.subr.bf16.mxu0 0
        %618 = vmatpush1.bf16.msra.mxu0 %v605
        %619 = vmatprep.subr.bf16.mxu0 0
        %620 = vmatpush1.bf16.msra.mxu0 %v604
        %621 = vmatprep.subr.bf16.mxu0 0
        %622 = vmatpush1.bf16.msra.mxu0 %v603
        %623 = vmatprep.subr.bf16.mxu0 0
        %624 = vmatpush1.bf16.msra.mxu0 %v602
        %625 = vmatprep.subr.bf16.mxu0 0
        %626 = vmatpush1.bf16.msra.mxu0 %v601
        %627 = vmatprep.subr.bf16.mxu0 0
        %628 = vmatpush1.bf16.msra.mxu0 %v600
        %629 = vmatprep.subr.bf16.mxu0 0
        %630 = vmatpush1.bf16.msra.mxu0 %v599
        %631 = vmatprep.subr.bf16.mxu0 0
        %632 = vmatpush2.bf16.msra.mxu0 0
        %633 = vmatprep.subr.bf16.mxu0 0
        %634 = vmatpush2.bf16.msra.mxu0 0
        %635 = vmatprep.subr.bf16.mxu0 0
        %636 = vmatpush2.bf16.msra.mxu0 0
        %637 = vmatprep.subr.bf16.mxu0 0
        %638 = vmatpush2.bf16.msra.mxu0 0
        %639 = vmatprep.subr.bf16.mxu0 0
        %640 = vmatpush2.bf16.msra.mxu0 0
        %641 = vmatprep.subr.bf16.mxu0 0
        %642 = vmatpush2.bf16.msra.mxu0 0
        %643 = vmatprep.subr.bf16.mxu0 0
        %644 = vmatpush2.bf16.msra.mxu0 0
        %645 = vmatprep.subr.bf16.mxu0 0
        %646 = vmatpush2.bf16.msra.mxu0 0
        %647 = vmatprep.mubr.bf16.mxu0 0
        %648 = vmatmul.mubr.bf16.gmra.mxu0 %v543
        %v649 = vpop.f32.mrf.mxu0
        %v650 = vadd.f32 %v565, %v649
        %v651 = vpop.f32.mrf.mxu0
        %v652 = vpop.f32.mrf.mxu0
        %v653 = vadd.f32 %v565, %v652
        %v654 = vpop.f32.mrf.mxu0
        %655 = vdwg.mxu0
        %vm656 = vcmp.ge.s32.totalorder %v517, 0
        %vm657 = vcmp.lt.s32.totalorder %v517, 8
        %vm658 = vmand %vm656, %vm657
        %v659 = vsel %vm658, %v650, -1e+30
        %v660 = vsel %vm658, %v653, -1e+30
        %661 = vmax.xlane.f32.xlu0 %v659
        %v662 = vpop.xlane.xlu0 %661
        %663 = vmax.xlane.f32.xlu0 %v660
        %v664 = vpop.xlane.xlu0 %663
        %v665 = vsub.f32 %v659, %v662
        %v666 = vsub.f32 %v660, %v664
        %v667 = vmul.f32 %v665, 1.442695
        %v668 = vpow.pop %v667
        %v669 = vmul.f32 %v666, 1.442695
        %v670 = vpow.pop %v669
        %v671 = vsel %vm658, %v668, 0.0
        %v672 = vsel %vm658, %v670, 0.0
        %673 = vadd.xlane.f32.xlu0 %v671
        %v674 = vpop.xlane.xlu0 %673
        %675 = vadd.xlane.f32.xlu0 %v672
        %v676 = vpop.xlane.xlu0 %675
        %v677 = vrcp.pop %v674
        %v678 = vrcp.pop %v676
        %v679 = vmul.f32 %v671, %v677
        %v680 = vmul.f32 %v672, %v678
        %v681 = vadd.f32 %v541, %v679
        %v682 = vadd.f32 %v542, %v680
        %683 = vst [vmem:[%s346] sm:$0xff] %v681
        %684 = vst [vmem:[%s346 + $0x8] sm:$0xff] %v682
        %s685 = sand.u32 %s186, 1
        %s686 = scalar_lea.sflag [#allocation4], %s685
        %s687 = sand.u32 %s186, 1
        %s688 = smul.addr %s687, 16
        %s689 = scalar_lea.vmem [#allocation10], %s688
        // Predicated region
        $region65: #{tpu_custom_call.1} parent=47 // pred_check
          %p690 = pneg %p196
        $region66: #{tpu_custom_call.1} parent=47 // pred_check_branch
          %692 = sbr.rel (%p690) target = $region68
        $region67: #{tpu_custom_call.1} parent=47 // pred_region
          %s693 = smul.u32 2, %s26
          %s694 = ssub.s32 3, %s693
          %p695 = scmp.lt.s32.totalorder %s694, 2
          %s696 = scalar_select %p695, %s694, 2
          %s697 = smul.u32 128, %s696
          %s699 = ssub.s32 256, %s697
          %700 = vsyncadd %s686, %s699
          %p701 = scmp.ne.s32.totalorder 0, %s697
          %s702 = smul.addr %s693, 128
          %s703 = scalar_lea.hbm %s7, %s702
          %s704 = smul.u32 8, %s696
          %s705 = sshll.u32 %s689, 4
          %s706 = int_to_ptr.vmem [resolvable:$true] %s705
          %s707 = sshll.u32 %s704, 4
          %711 = dma.vmem_to_hbm [thread:$0]  (%p701), %s706, %s707, %s703, %s686, 128, 128, 8
        $region68: #{tpu_custom_call.1} parent=47 // pred_fallthru
          _
      $region48: #{tpu_custom_call.1} parent=5 // pred_fallthru
        _
      %p712 = scmp.le.s32.totalorder 2, %s21
      // Predicated region
      $region69: #{tpu_custom_call.1} parent=5 // pred_check
        %p713 = pneg %p712
      $region70: #{tpu_custom_call.1} parent=5 // pred_check_branch
        %715 = sbr.rel (%p713) target = $region72
      $region71: #{tpu_custom_call.1} parent=5 // pred_region
        %s716 = ssub.s32 %s21, 2
        // Predicated region
        $region73: #{tpu_custom_call.1} parent=71 // pred_check
          %p717 = pneg %p202
        $region74: #{tpu_custom_call.1} parent=71 // pred_check_branch
          %719 = sbr.rel (%p717) target = $region76
        $region75: #{tpu_custom_call.1} parent=71 // pred_region
          %s720 = sand.u32 %s187, 1
          %s721 = scalar_lea.sflag [#allocation4], %s720
          %s722 = sand.u32 %s187, 1
          %s723 = smul.addr %s722, 16
          %s724 = scalar_lea.vmem [#allocation10], %s723
          %725 = dma.done %s721, 256
        $region76: #{tpu_custom_call.1} parent=71 // pred_fallthru
          _
      $region72: #{tpu_custom_call.1} parent=5 // pred_fallthru
        _
    $region6: #{tpu_custom_call.1} parent=1 // loop_footer
      %s25 = sadd.s32 1, %s21
    $region7: #{tpu_custom_call.1} parent=1 // loop_footer_branch
      %20 = sbr.rel target = $region3
    $region8: #{tpu_custom_call.1} parent=1 // loop_exit
      _
    %726 = vsyncpa [#allocation3], 1
    %s727 = scalar_lea.sflag [#allocation3], 1
    %728 = vsyncpa %s727, 1
    %729 = vsyncpa [#allocation6], 1
    %730 = vsyncpa [#allocation9], 1
    %731 = vsyncpa [#allocation4], 1
    %s732 = scalar_lea.sflag [#allocation4], 1
    %733 = vsyncpa %s732, 1

</llo_original>
